<compile_context>
chip_gen: v7x
topology: tpu7x:2x2x1
jax: 0.10.0
libtpu: 0.0.40
codegen_flags: <defaults>
</compile_context>

<pallas_src>
import functools

import jax
import jax.numpy as jnp
from jax import lax
from jax.experimental import pallas as pl
from jax.experimental.pallas import tpu as pltpu


def _round_up(x, m):
    return (x + m - 1) // m * m


def _vmem_budget_bytes():
    """Per-chip VMEM budget with headroom (v5e/v6e: 128 MiB, v7x: 64 MiB)."""
    try:
        cap = int(pltpu.get_tpu_info().vmem_capacity_bytes)
    except Exception:
        cap = 64 * 1024 * 1024          # conservative fallback: v7x per-TC VMEM
    return (cap * 3) // 4               # leave headroom for compiler-internal scratch


def _cross_layer(x, x0, w_t, gamma, beta, *, eps, inv_batch, matmul_dtype):
    """One cross layer: z = x @ W^T (bias cancels), y = BN(z), return y*x0 + x."""
    # MXU matmul with f32 accumulation; operands optionally bf16.
    z = jnp.dot(x.astype(matmul_dtype), w_t.astype(matmul_dtype),
                preferred_element_type=jnp.float32)              # (B, D) f32
    # Single-pass BN stats: two independent reductions (ILP), divided by the
    # REAL batch size so zero-padded rows contribute nothing.
    mean = jnp.sum(z, axis=0, keepdims=True) * inv_batch          # (1, D)
    ex2 = jnp.sum(z * z, axis=0, keepdims=True) * inv_batch       # (1, D)
    var = ex2 - mean * mean
    scale = gamma * lax.rsqrt(var + eps)                          # rsqrt -> EUP
    y = (z - mean) * scale + beta                                 # 2 VPU passes
    return y * x0 + x


def _crossnet_resident_kernel(x0_ref, w_ref, gb_ref, out_ref, *,
                              eps, num_layers, inv_batch, matmul_dtype):
    """All L weights resident in VMEM; layer loop unrolled in-kernel."""
    x0 = x0_ref[...].astype(jnp.float32)

    def body(l, x):
        gb = gb_ref[l].astype(jnp.float32)          # (2, Dp): [gamma; beta]
        return _cross_layer(x, x0, w_ref[l], gb[0:1, :], gb[1:2, :],
                            eps=eps, inv_batch=inv_batch,
                            matmul_dtype=matmul_dtype)

    # Running cross state is the loop carry: no dedicated (B, D) scratch buffer.
    x = lax.fori_loop(0, num_layers, body, x0, unroll=True)
    out_ref[...] = x.astype(out_ref.dtype)


def _crossnet_stream_kernel(x0_ref, w_ref, gb_ref, out_ref, *,
                            eps, inv_batch, matmul_dtype):
    """grid=(L,): per-layer weight tile streamed; x0/out blocks resident.

    The output block (constant block index => stays resident across the layer
    axis) doubles as the running cross state, so no extra scratch is needed."""
    layer = pl.program_id(0)

    @pl.when(layer == 0)
    def _():
        out_ref[...] = x0_ref[...].astype(out_ref.dtype)

    x0 = x0_ref[...].astype(jnp.float32)
    x = out_ref[...].astype(jnp.float32)            # running state (f32 output block)
    gb = gb_ref[layer].astype(jnp.float32)          # whole (L, 2, Dp) table is resident
    x_new = _cross_layer(x, x0, w_ref[0], gb[0:1, :], gb[1:2, :],
                         eps=eps, inv_batch=inv_batch, matmul_dtype=matmul_dtype)
    out_ref[...] = x_new.astype(out_ref.dtype)


def prepare_crossnet_params(w, gamma, beta, use_bf16_matmul=True):
    """One-time parameter prep, hoisted out of the forward path.

    w: (L, out, in) PyTorch Linear weights. The Linear bias is intentionally
    dropped (it cancels exactly under training-mode BatchNorm).
    Returns:
      w_p:  (L, Dp, Dp) weights transposed to (in, out) and zero-padded to a
            lane-dense Dp (multiple of 128), optionally cast to bf16.
      gb_p: (L, 2, Dp) fused [gamma; beta] table, f32, zero-padded.
    """
    num_layers, hidden_dim, _ = w.shape
    dp = _round_up(hidden_dim, 128)
    w_t = jnp.transpose(w.astype(jnp.float32), (0, 2, 1))        # (L, in, out)
    w_p = (jnp.zeros((num_layers, dp, dp), jnp.float32)
           .at[:, :hidden_dim, :hidden_dim].set(w_t))
    if use_bf16_matmul:
        w_p = w_p.astype(jnp.bfloat16)   # halves weight DMA bytes + resident VMEM
    gb_p = jnp.zeros((num_layers, 2, dp), jnp.float32)
    gb_p = gb_p.at[:, 0, :hidden_dim].set(gamma.astype(jnp.float32))
    gb_p = gb_p.at[:, 1, :hidden_dim].set(beta.astype(jnp.float32))
    return w_p, gb_p


def crossnet_pallas(x0, w_p, gb_p, eps=1e-5, force_stream=False):
    """CrossNet forward. x0: (B, D) f32; w_p/gb_p from prepare_crossnet_params."""
    batch, hidden_dim = x0.shape
    num_layers, dp, _ = w_p.shape
    bp = _round_up(max(batch, 8), 8)
    matmul_dtype = w_p.dtype

    # Zero-pad activations to (bp, dp).  BN stats divide by the real batch, so
    # padded rows/columns stay exactly zero through every layer.
    if (bp, dp) != (batch, hidden_dim):
        x0_p = (jnp.zeros((bp, dp), jnp.float32)
                .at[:batch, :hidden_dim].set(x0.astype(jnp.float32)))
    else:
        x0_p = x0.astype(jnp.float32)
    inv_batch = 1.0 / batch

    budget = _vmem_budget_bytes()
    w_bytes = num_layers * dp * dp * jnp.dtype(matmul_dtype).itemsize
    gb_bytes = num_layers * 2 * dp * 4
    io_bytes = 2 * bp * dp * 4
    resident_need = 2 * (w_bytes + gb_bytes + io_bytes)   # 2x safety margin
    use_resident = (not force_stream) and (resident_need <= budget // 2)

    if use_resident:
        # Small-weight regime: no layer grid, everything resident in VMEM,
        # layers unrolled in-kernel (no per-step pipeliner/DMA overhead).
        out_p = pl.pallas_call(
            functools.partial(_crossnet_resident_kernel, eps=eps,
                              num_layers=num_layers, inv_batch=inv_batch,
                              matmul_dtype=matmul_dtype),
            out_shape=jax.ShapeDtypeStruct((bp, dp), jnp.float32),
            compiler_params=pltpu.CompilerParams(vmem_limit_bytes=budget),
        )(x0_p, w_p, gb_p)
    else:
        # Streaming regime: per-layer (Dp, Dp) weight tiles streamed HBM->VMEM
        # (3-deep buffering); x0, the output/running-state block and the fused
        # gamma/beta table stay resident across the layer axis.
        grid_spec = pltpu.PrefetchScalarGridSpec(
            num_scalar_prefetch=0,
            grid=(num_layers,),
            in_specs=[
                pl.BlockSpec((bp, dp), lambda l: (0, 0)),                 # x0 resident
                pl.BlockSpec((1, dp, dp), lambda l: (l, 0, 0),
                             pipeline_mode=pl.Buffered(3)),               # weights streamed
                pl.BlockSpec((num_layers, 2, dp), lambda l: (0, 0, 0)),   # gamma/beta resident
            ],
            out_specs=pl.BlockSpec((bp, dp), lambda l: (0, 0)),           # running state
        )
        out_p = pl.pallas_call(
            functools.partial(_crossnet_stream_kernel, eps=eps,
                              inv_batch=inv_batch, matmul_dtype=matmul_dtype),
            out_shape=jax.ShapeDtypeStruct((bp, dp), jnp.float32),
            grid_spec=grid_spec,
            compiler_params=pltpu.CompilerParams(
                dimension_semantics=("arbitrary",),   # layer axis carries state
                vmem_limit_bytes=budget),
        )(x0_p, w_p, gb_p)

    return out_p[:batch, :hidden_dim].astype(x0.dtype)


def crossnet_reference(x0, w, b, gamma, beta, eps=1e-5):
    """Pure-JAX reference mirroring the PyTorch forward (train-mode BN, with bias)."""
    x = x0
    for l in range(w.shape[0]):
        z = x @ w[l].T + b[l]
        mean = jnp.mean(z, axis=0, keepdims=True)
        var = jnp.mean((z - mean) ** 2, axis=0, keepdims=True)
        y = (z - mean) / jnp.sqrt(var + eps) * gamma[l] + beta[l]
        x = y * x0 + x
    return x


if __name__ == "__main__":
    batch, hidden_dim, num_layers = 8, 32, 3

    key = jax.random.PRNGKey(0)
    k_x, k_w, k_b, k_g, k_be = jax.random.split(key, 5)

    x0 = jax.random.normal(k_x, (batch, hidden_dim), dtype=jnp.float32)

    # Synthetic parameters matching nn.Linear(D, D) + nn.BatchNorm1d(D) per layer.
    bound = 1.0 / jnp.sqrt(hidden_dim)
    w = jax.random.uniform(k_w, (num_layers, hidden_dim, hidden_dim),
                           minval=-bound, maxval=bound, dtype=jnp.float32)  # (out, in)
    b = jax.random.uniform(k_b, (num_layers, hidden_dim),
                           minval=-bound, maxval=bound, dtype=jnp.float32)
    gamma = 1.0 + 0.1 * jax.random.normal(k_g, (num_layers, hidden_dim), dtype=jnp.float32)
    beta = 0.1 * jax.random.normal(k_be, (num_layers, hidden_dim), dtype=jnp.float32)

    ref = crossnet_reference(x0, w, b, gamma, beta)

    # Fast path (default): bf16 MXU operands, f32 accumulation / BN math.
    w_bf16, gb = prepare_crossnet_params(w, gamma, beta, use_bf16_matmul=True)
    out_fast = jax.block_until_ready(crossnet_pallas(x0, w_bf16, gb))

    # Exact-semantics path: f32 matmul, validated tightly against PyTorch math.
    w_f32, gb_f32 = prepare_crossnet_params(w, gamma, beta, use_bf16_matmul=False)
    out_exact = jax.block_until_ready(crossnet_pallas(x0, w_f32, gb_f32))

    assert out_exact.shape == (batch, hidden_dim)
    assert out_fast.shape == (batch, hidden_dim)
    assert jnp.allclose(out_exact, ref, atol=1e-4, rtol=1e-4), "f32 kernel mismatch"
    # bf16 operands carry ~2^-8 relative error per element; loose sanity bound only.
    assert jnp.allclose(out_fast, ref, atol=1e-1, rtol=1e-1), "bf16 kernel mismatch"

    print("KERNEL_OK")
</pallas_src>

<mosaic_0001>
module attributes {stable_mosaic.version = 11 : i64} {
  func.func @_crossnet_resident_kernel(%arg0: memref<8x128xf32, #tpu.memory_space<vmem>>, %arg1: memref<3x128x128xbf16, #tpu.memory_space<vmem>>, %arg2: memref<3x2x128xf32, #tpu.memory_space<vmem>>, %arg3: memref<8x128xf32, #tpu.memory_space<vmem>>) attributes {dimension_semantics = [], scalar_prefetch = 0 : i64, scratch_operands = 0 : i64, tpu.core_type = #tpu.core_type<tc>} {
    %c0 = arith.constant 0 : index
    %c0_0 = arith.constant 0 : index
    %0 = vector.load %arg0[%c0, %c0_0] : memref<8x128xf32, #tpu.memory_space<vmem>>, vector<8x128xf32>
    %c0_i32 = arith.constant 0 : i32
    %1 = arith.index_cast %c0_i32 : i32 to index
    %c0_1 = arith.constant 0 : index
    %c0_2 = arith.constant 0 : index
    %2 = vector.load %arg2[%1, %c0_1, %c0_2] : memref<3x2x128xf32, #tpu.memory_space<vmem>>, vector<1x2x128xf32>
    %3 = vector.shape_cast %2 : vector<1x2x128xf32> to vector<2x128xf32>
    %4 = arith.index_cast %c0_i32 : i32 to index
    %c0_3 = arith.constant 0 : index
    %c0_4 = arith.constant 0 : index
    %5 = vector.load %arg1[%4, %c0_3, %c0_4] : memref<3x128x128xbf16, #tpu.memory_space<vmem>>, vector<1x128x128xbf16>
    %6 = vector.shape_cast %5 : vector<1x128x128xbf16> to vector<128x128xbf16>
    %7 = vector.extract_strided_slice %3 {offsets = [0, 0], sizes = [1, 128], strides = [1, 1]} : vector<2x128xf32> to vector<1x128xf32>
    %8 = vector.extract_strided_slice %3 {offsets = [1, 0], sizes = [1, 128], strides = [1, 1]} : vector<2x128xf32> to vector<1x128xf32>
    %9 = arith.truncf %0 : vector<8x128xf32> to vector<8x128xbf16>
    %cst = arith.constant dense<0.000000e+00> : vector<8x128xf32>
    %10 = tpu.matmul %9, %6, %cst {dimension_numbers = #tpu.dot_dimension_numbers<[1], [0], [0], [1], [0, 0, 1, 1], [], []>} : vector<8x128xbf16>, vector<128x128xbf16>, vector<8x128xf32> -> vector<8x128xf32>
    %cst_5 = arith.constant dense<0.000000e+00> : vector<128xf32>
    %11 = vector.multi_reduction <add>, %10, %cst_5 [0] : vector<8x128xf32> to vector<128xf32>
    %12 = vector.shape_cast %11 : vector<128xf32> to vector<1x128xf32>
    %cst_6 = arith.constant 1.250000e-01 : f32
    %13 = vector.broadcast %cst_6 : f32 to vector<1x128xf32>
    %14 = arith.mulf %12, %13 : vector<1x128xf32>
    %15 = arith.mulf %10, %10 : vector<8x128xf32>
    %cst_7 = arith.constant dense<0.000000e+00> : vector<128xf32>
    %16 = vector.multi_reduction <add>, %15, %cst_7 [0] : vector<8x128xf32> to vector<128xf32>
    %17 = vector.shape_cast %16 : vector<128xf32> to vector<1x128xf32>
    %cst_8 = arith.constant 1.250000e-01 : f32
    %18 = vector.broadcast %cst_8 : f32 to vector<1x128xf32>
    %19 = arith.mulf %17, %18 : vector<1x128xf32>
    %20 = arith.mulf %14, %14 : vector<1x128xf32>
    %21 = arith.subf %19, %20 : vector<1x128xf32>
    %cst_9 = arith.constant 9.99999974E-6 : f32
    %22 = vector.broadcast %cst_9 : f32 to vector<1x128xf32>
    %23 = arith.addf %21, %22 : vector<1x128xf32>
    %24 = math.rsqrt %23 : vector<1x128xf32>
    %25 = arith.mulf %7, %24 : vector<1x128xf32>
    %26 = vector.broadcast %14 : vector<1x128xf32> to vector<8x128xf32>
    %27 = arith.subf %10, %26 : vector<8x128xf32>
    %28 = vector.broadcast %25 : vector<1x128xf32> to vector<8x128xf32>
    %29 = arith.mulf %27, %28 : vector<8x128xf32>
    %30 = vector.broadcast %8 : vector<1x128xf32> to vector<8x128xf32>
    %31 = arith.addf %29, %30 : vector<8x128xf32>
    %32 = arith.mulf %31, %0 : vector<8x128xf32>
    %33 = arith.addf %32, %0 : vector<8x128xf32>
    %c1_i32 = arith.constant 1 : i32
    %34 = arith.index_cast %c1_i32 : i32 to index
    %c0_10 = arith.constant 0 : index
    %c0_11 = arith.constant 0 : index
    %35 = vector.load %arg2[%34, %c0_10, %c0_11] : memref<3x2x128xf32, #tpu.memory_space<vmem>>, vector<1x2x128xf32>
    %36 = vector.shape_cast %35 : vector<1x2x128xf32> to vector<2x128xf32>
    %37 = arith.index_cast %c1_i32 : i32 to index
    %c0_12 = arith.constant 0 : index
    %c0_13 = arith.constant 0 : index
    %38 = vector.load %arg1[%37, %c0_12, %c0_13] : memref<3x128x128xbf16, #tpu.memory_space<vmem>>, vector<1x128x128xbf16>
    %39 = vector.shape_cast %38 : vector<1x128x128xbf16> to vector<128x128xbf16>
    %40 = vector.extract_strided_slice %36 {offsets = [0, 0], sizes = [1, 128], strides = [1, 1]} : vector<2x128xf32> to vector<1x128xf32>
    %41 = vector.extract_strided_slice %36 {offsets = [1, 0], sizes = [1, 128], strides = [1, 1]} : vector<2x128xf32> to vector<1x128xf32>
    %42 = arith.truncf %33 : vector<8x128xf32> to vector<8x128xbf16>
    %cst_14 = arith.constant dense<0.000000e+00> : vector<8x128xf32>
    %43 = tpu.matmul %42, %39, %cst_14 {dimension_numbers = #tpu.dot_dimension_numbers<[1], [0], [0], [1], [0, 0, 1, 1], [], []>} : vector<8x128xbf16>, vector<128x128xbf16>, vector<8x128xf32> -> vector<8x128xf32>
    %cst_15 = arith.constant dense<0.000000e+00> : vector<128xf32>
    %44 = vector.multi_reduction <add>, %43, %cst_15 [0] : vector<8x128xf32> to vector<128xf32>
    %45 = vector.shape_cast %44 : vector<128xf32> to vector<1x128xf32>
    %cst_16 = arith.constant 1.250000e-01 : f32
    %46 = vector.broadcast %cst_16 : f32 to vector<1x128xf32>
    %47 = arith.mulf %45, %46 : vector<1x128xf32>
    %48 = arith.mulf %43, %43 : vector<8x128xf32>
    %cst_17 = arith.constant dense<0.000000e+00> : vector<128xf32>
    %49 = vector.multi_reduction <add>, %48, %cst_17 [0] : vector<8x128xf32> to vector<128xf32>
    %50 = vector.shape_cast %49 : vector<128xf32> to vector<1x128xf32>
    %cst_18 = arith.constant 1.250000e-01 : f32
    %51 = vector.broadcast %cst_18 : f32 to vector<1x128xf32>
    %52 = arith.mulf %50, %51 : vector<1x128xf32>
    %53 = arith.mulf %47, %47 : vector<1x128xf32>
    %54 = arith.subf %52, %53 : vector<1x128xf32>
    %cst_19 = arith.constant 9.99999974E-6 : f32
    %55 = vector.broadcast %cst_19 : f32 to vector<1x128xf32>
    %56 = arith.addf %54, %55 : vector<1x128xf32>
    %57 = math.rsqrt %56 : vector<1x128xf32>
    %58 = arith.mulf %40, %57 : vector<1x128xf32>
    %59 = vector.broadcast %47 : vector<1x128xf32> to vector<8x128xf32>
    %60 = arith.subf %43, %59 : vector<8x128xf32>
    %61 = vector.broadcast %58 : vector<1x128xf32> to vector<8x128xf32>
    %62 = arith.mulf %60, %61 : vector<8x128xf32>
    %63 = vector.broadcast %41 : vector<1x128xf32> to vector<8x128xf32>
    %64 = arith.addf %62, %63 : vector<8x128xf32>
    %65 = arith.mulf %64, %0 : vector<8x128xf32>
    %66 = arith.addf %65, %33 : vector<8x128xf32>
    %c2_i32 = arith.constant 2 : i32
    %67 = arith.index_cast %c2_i32 : i32 to index
    %c0_20 = arith.constant 0 : index
    %c0_21 = arith.constant 0 : index
    %68 = vector.load %arg2[%67, %c0_20, %c0_21] : memref<3x2x128xf32, #tpu.memory_space<vmem>>, vector<1x2x128xf32>
    %69 = vector.shape_cast %68 : vector<1x2x128xf32> to vector<2x128xf32>
    %70 = arith.index_cast %c2_i32 : i32 to index
    %c0_22 = arith.constant 0 : index
    %c0_23 = arith.constant 0 : index
    %71 = vector.load %arg1[%70, %c0_22, %c0_23] : memref<3x128x128xbf16, #tpu.memory_space<vmem>>, vector<1x128x128xbf16>
    %72 = vector.shape_cast %71 : vector<1x128x128xbf16> to vector<128x128xbf16>
    %73 = vector.extract_strided_slice %69 {offsets = [0, 0], sizes = [1, 128], strides = [1, 1]} : vector<2x128xf32> to vector<1x128xf32>
    %74 = vector.extract_strided_slice %69 {offsets = [1, 0], sizes = [1, 128], strides = [1, 1]} : vector<2x128xf32> to vector<1x128xf32>
    %75 = arith.truncf %66 : vector<8x128xf32> to vector<8x128xbf16>
    %cst_24 = arith.constant dense<0.000000e+00> : vector<8x128xf32>
    %76 = tpu.matmul %75, %72, %cst_24 {dimension_numbers = #tpu.dot_dimension_numbers<[1], [0], [0], [1], [0, 0, 1, 1], [], []>} : vector<8x128xbf16>, vector<128x128xbf16>, vector<8x128xf32> -> vector<8x128xf32>
    %cst_25 = arith.constant dense<0.000000e+00> : vector<128xf32>
    %77 = vector.multi_reduction <add>, %76, %cst_25 [0] : vector<8x128xf32> to vector<128xf32>
    %78 = vector.shape_cast %77 : vector<128xf32> to vector<1x128xf32>
    %cst_26 = arith.constant 1.250000e-01 : f32
    %79 = vector.broadcast %cst_26 : f32 to vector<1x128xf32>
    %80 = arith.mulf %78, %79 : vector<1x128xf32>
    %81 = arith.mulf %76, %76 : vector<8x128xf32>
    %cst_27 = arith.constant dense<0.000000e+00> : vector<128xf32>
    %82 = vector.multi_reduction <add>, %81, %cst_27 [0] : vector<8x128xf32> to vector<128xf32>
    %83 = vector.shape_cast %82 : vector<128xf32> to vector<1x128xf32>
    %cst_28 = arith.constant 1.250000e-01 : f32
    %84 = vector.broadcast %cst_28 : f32 to vector<1x128xf32>
    %85 = arith.mulf %83, %84 : vector<1x128xf32>
    %86 = arith.mulf %80, %80 : vector<1x128xf32>
    %87 = arith.subf %85, %86 : vector<1x128xf32>
    %cst_29 = arith.constant 9.99999974E-6 : f32
    %88 = vector.broadcast %cst_29 : f32 to vector<1x128xf32>
    %89 = arith.addf %87, %88 : vector<1x128xf32>
    %90 = math.rsqrt %89 : vector<1x128xf32>
    %91 = arith.mulf %73, %90 : vector<1x128xf32>
    %92 = vector.broadcast %80 : vector<1x128xf32> to vector<8x128xf32>
    %93 = arith.subf %76, %92 : vector<8x128xf32>
    %94 = vector.broadcast %91 : vector<1x128xf32> to vector<8x128xf32>
    %95 = arith.mulf %93, %94 : vector<8x128xf32>
    %96 = vector.broadcast %74 : vector<1x128xf32> to vector<8x128xf32>
    %97 = arith.addf %95, %96 : vector<8x128xf32>
    %98 = arith.mulf %97, %0 : vector<8x128xf32>
    %99 = arith.addf %98, %66 : vector<8x128xf32>
    %c3_i32 = arith.constant 3 : i32
    %c0_30 = arith.constant 0 : index
    %c0_31 = arith.constant 0 : index
    %100 = vector.load %arg3[%c0_30, %c0_31] : memref<8x128xf32, #tpu.memory_space<vmem>>, vector<8x128xf32>
    tpu.vector_store %arg3[%c0_30, %c0_31], %99 {strides = array<i32>} : memref<8x128xf32, #tpu.memory_space<vmem>>, vector<8x128xf32>,
    return
  }
}

</mosaic_0001>

<llo_original>
// kernel: tpu_custom_call.1
$region0: #{tpu_custom_call.1}
  #allocation0 [shape = 'u32[]', space=smem, size = 0x4, offset = 0x4, fixed_abs, tag = 'smem constant byte address 0x4 - core index']
  #allocation1 [shape = 'u32[144,128]{1,0:T(1,128)}', space=vmem, size = 0x12000, scoped, tag = 'internal scratch']
  %s0 = inlined_call_operand.hbm [shape: f32[8,128], index: 0, kind: input, shape index: {}]
  %s1 = inlined_call_operand.hbm [shape: bf16[3,128,128], index: 1, kind: input, shape index: {}]
  %s2 = inlined_call_operand.vmem [shape: f32[3,2,128], index: 2, kind: input, shape index: {}]
  %s3 = inlined_call_operand.hbm [shape: f32[8,128], index: 3, kind: output, shape index: {}]
  %s4 = sld [smem:[#allocation0]]
  $region30: #{tpu_custom_call.1} parent=0
    _
  %s6 = ssub.s32 1, %s4
  %s7 = scalar_select 0, %s6, %s4
  $region1: #{tpu_custom_call.1} parent=0
    #allocation2 [shape = 'u8[4096]{0}', space=vmem, size = 0x1000, scoped, tag = 'input window, operand 0, single buffered']
    #allocation3 [shape = 's32[1]{0}', space=sflag, size = 0x4, scoped, tag = 'scoped memory for tpu_custom_call.1']
    #allocation4 [shape = 's32[1]{0}', space=sflag, size = 0x4, scoped, tag = 'scoped memory for tpu_custom_call.1']
    #allocation5 [shape = 'u8[98304]{0}', space=vmem, size = 0x18000, scoped, tag = 'input window, operand 1, single buffered']
    #allocation6 [shape = 's32[1]{0}', space=sflag, size = 0x4, scoped, tag = 'scoped memory for tpu_custom_call.1']
    #allocation7 [shape = 'u8[4096]{0}', space=vmem, size = 0x1000, scoped, tag = 'output window, operand 0, single buffered']
    %8 = vsyncpa [#allocation3], 0
    %9 = vsyncpa [#allocation6], 0
    %10 = vsyncpa [#allocation4], 0
    // Predicated region
    $region2: #{tpu_custom_call.1} parent=1 // pred_check
      _
    $region3: #{tpu_custom_call.1} parent=1 // pred_check_branch
      %12 = sbr.rel (0) target = $region5
    $region4: #{tpu_custom_call.1} parent=1 // pred_region
      %s14 = ssub.s32 128, 128
      %15 = vsyncadd [#allocation3], %s14
      %s17 = sshll.u32 [#allocation2], 4
      %s18 = int_to_ptr.vmem [resolvable:$true] %s17
      %20 = dma.hbm_to_vmem [thread:$0]  %s0, 128, %s18, [#allocation3]
    $region5: #{tpu_custom_call.1} parent=1 // pred_fallthru
      _
    // Predicated region
    $region6: #{tpu_custom_call.1} parent=1 // pred_check
      _
    $region7: #{tpu_custom_call.1} parent=1 // pred_check_branch
      %22 = sbr.rel (0) target = $region9
    $region8: #{tpu_custom_call.1} parent=1 // pred_region
      %s24 = ssub.s32 3072, 3072
      %25 = vsyncadd [#allocation6], %s24
      %s26 = sshll.u32 [#allocation5], 4
      %s27 = int_to_ptr.vmem [resolvable:$true] %s26
      %32 = dma.hbm_to_vmem [thread:$0]  %s1, 3072, %s27, [#allocation6], 64, 64, 4
    $region9: #{tpu_custom_call.1} parent=1 // pred_fallthru
      _
    // Predicated region
    $region10: #{tpu_custom_call.1} parent=1 // pred_check
      _
    $region11: #{tpu_custom_call.1} parent=1 // pred_check_branch
      %34 = sbr.rel (0) target = $region13
    $region12: #{tpu_custom_call.1} parent=1 // pred_region
      _
    $region13: #{tpu_custom_call.1} parent=1 // pred_fallthru
      _
    // Predicated region
    $region14: #{tpu_custom_call.1} parent=1 // pred_check
      _
    $region15: #{tpu_custom_call.1} parent=1 // pred_check_branch
      %36 = sbr.rel (0) target = $region17
    $region16: #{tpu_custom_call.1} parent=1 // pred_region
      %37 = dma.done [#allocation3], 128
    $region17: #{tpu_custom_call.1} parent=1 // pred_fallthru
      _
    // Predicated region
    $region18: #{tpu_custom_call.1} parent=1 // pred_check
      _
    $region19: #{tpu_custom_call.1} parent=1 // pred_check_branch
      %39 = sbr.rel (0) target = $region21
    $region20: #{tpu_custom_call.1} parent=1 // pred_region
      %40 = dma.done [#allocation6], 3072
    $region21: #{tpu_custom_call.1} parent=1 // pred_fallthru
      _
    %v42 = vld [vmem:[#allocation2] sm:$0xff]
    %v43 = vld [vmem:[%s2] sm:$0x3]
    %v44 = vld [vmem:[#allocation5] sm:$0xf]
    %v45 = vld [vmem:[#allocation5 + $0x4] sm:$0xf]
    %v46 = vld [vmem:[#allocation5 + $0x8] sm:$0xf]
    %v47 = vld [vmem:[#allocation5 + $0xc] sm:$0xf]
    %v48 = vld [vmem:[#allocation5 + $0x10] sm:$0xf]
    %v49 = vld [vmem:[#allocation5 + $0x14] sm:$0xf]
    %v50 = vld [vmem:[#allocation5 + $0x18] sm:$0xf]
    %v51 = vld [vmem:[#allocation5 + $0x1c] sm:$0xf]
    %v52 = vld [vmem:[#allocation5 + $0x20] sm:$0xf]
    %v53 = vld [vmem:[#allocation5 + $0x24] sm:$0xf]
    %v54 = vld [vmem:[#allocation5 + $0x28] sm:$0xf]
    %v55 = vld [vmem:[#allocation5 + $0x2c] sm:$0xf]
    %v56 = vld [vmem:[#allocation5 + $0x30] sm:$0xf]
    %v57 = vld [vmem:[#allocation5 + $0x34] sm:$0xf]
    %v58 = vld [vmem:[#allocation5 + $0x38] sm:$0xf]
    %v59 = vld [vmem:[#allocation5 + $0x3c] sm:$0xf]
    %v60 = vpack.c.bf16 %v42, %v42
    %v77 = vunpack.c.l.b16 %v44
    %v78 = vunpack.c.l.b16 %v45
    %v79 = vunpack.c.l.b16 %v46
    %v80 = vunpack.c.l.b16 %v47
    %v81 = vunpack.c.l.b16 %v48
    %v82 = vunpack.c.l.b16 %v49
    %v83 = vunpack.c.l.b16 %v50
    %v84 = vunpack.c.l.b16 %v51
    %v85 = vunpack.c.l.b16 %v52
    %v86 = vunpack.c.l.b16 %v53
    %v87 = vunpack.c.l.b16 %v54
    %v88 = vunpack.c.l.b16 %v55
    %v89 = vunpack.c.l.b16 %v56
    %v90 = vunpack.c.l.b16 %v57
    %v91 = vunpack.c.l.b16 %v58
    %v92 = vunpack.c.l.b16 %v59
    %v93 = vpack.c.b16 %v78, %v77
    %v94 = vpack.c.b16 %v80, %v79
    %v95 = vpack.c.b16 %v82, %v81
    %v96 = vpack.c.b16 %v84, %v83
    %v97 = vpack.c.b16 %v86, %v85
    %v98 = vpack.c.b16 %v88, %v87
    %v99 = vpack.c.b16 %v90, %v89
    %v100 = vpack.c.b16 %v92, %v91
    %109 = vmatprep.subr.bf16.mxu0 0
    %110 = vmatpush1.bf16.msra.mxu0 %v93
    %111 = vmatprep.subr.bf16.mxu0 0
    %112 = vmatpush1.bf16.msra.mxu0 %v94
    %113 = vmatprep.subr.bf16.mxu0 0
    %114 = vmatpush1.bf16.msra.mxu0 %v95
    %115 = vmatprep.subr.bf16.mxu0 0
    %116 = vmatpush1.bf16.msra.mxu0 %v96
    %117 = vmatprep.subr.bf16.mxu0 0
    %118 = vmatpush1.bf16.msra.mxu0 %v97
    %119 = vmatprep.subr.bf16.mxu0 0
    %120 = vmatpush1.bf16.msra.mxu0 %v98
    %121 = vmatprep.subr.bf16.mxu0 0
    %122 = vmatpush1.bf16.msra.mxu0 %v99
    %123 = vmatprep.subr.bf16.mxu0 0
    %124 = vmatpush1.bf16.msra.mxu0 %v100
    %125 = vmatprep.subr.bf16.mxu0 0
    %126 = vmatpush1.bf16.msra.mxu0 0
    %127 = vmatprep.subr.bf16.mxu0 0
    %128 = vmatpush1.bf16.msra.mxu0 0
    %129 = vmatprep.subr.bf16.mxu0 0
    %130 = vmatpush1.bf16.msra.mxu0 0
    %131 = vmatprep.subr.bf16.mxu0 0
    %132 = vmatpush1.bf16.msra.mxu0 0
    %133 = vmatprep.subr.bf16.mxu0 0
    %134 = vmatpush1.bf16.msra.mxu0 0
    %135 = vmatprep.subr.bf16.mxu0 0
    %136 = vmatpush1.bf16.msra.mxu0 0
    %137 = vmatprep.subr.bf16.mxu0 0
    %138 = vmatpush1.bf16.msra.mxu0 0
    %139 = vmatprep.subr.bf16.mxu0 0
    %140 = vmatpush1.bf16.msra.mxu0 0
    %141 = vmatprep.mubr.bf16.mxu0 0
    %142 = vmatmul.mubr.bf16.gmra.mrb[0].mxu0 %v60
    %v143 = vpop.f32.mrb[0].mxu0
    %v144 = vadd.f32 0.0, %v143
    %v145 = vpop.f32.mrb[0].mxu0
    %v146 = vpop.f32.mrb[0].mxu0
    %v147 = vpop.f32.mrb[0].mxu0
    %148 = vdwg.mxu0
    %v149 = vrot.slane %v144, 4
    %v150 = vadd.f32 %v144, %v149
    %v151 = vrot.slane %v150, 2
    %v152 = vadd.f32 %v150, %v151
    %v153 = vrot.slane %v152, 1
    %v154 = vadd.f32 %v152, %v153
    %v155 = vmul.f32 %v154, 0.125
    %v156 = vmul.f32 %v144, %v144
    %v157 = vrot.slane %v156, 4
    %v158 = vadd.f32 %v156, %v157
    %v159 = vrot.slane %v158, 2
    %v160 = vadd.f32 %v158, %v159
    %v161 = vrot.slane %v160, 1
    %v162 = vadd.f32 %v160, %v161
    %v163 = vmul.f32 %v162, 0.125
    %v164 = vmul.f32 %v155, %v155
    %v165 = vsub.f32 %v163, %v164
    %v166 = vadd.f32 %v165, 1e-05
    %v167 = vrsqrt.pop %v166
    %v168 = vmul.f32 %v43, %v167
    %v169 = vsub.f32 %v144, %v155
    %v170 = vlaneseq
    %v171 = vshrl.u32 %v170, 7
    %v172 = vsub.s32 0, %v171
    %v173 = vrot.slane %v168, %v172
    %v174 = vmul.f32 %v169, %v173
    %v175 = vlaneseq
    %v176 = vshrl.u32 %v175, 7
    %v177 = vsub.s32 1, %v176
    %v178 = vrot.slane %v43, %v177
    %v179 = vadd.f32 %v174, %v178
    %v180 = vmul.f32 %v179, %v42
    %v181 = vadd.f32 %v180, %v42
    %s182 = scalar_lea.vmem %s2, 2
    %v183 = vld [vmem:[%s182] sm:$0x3]
    %s184 = scalar_lea.vmem [#allocation5], 64
    %v185 = vld [vmem:[%s184] sm:$0xf]
    %v186 = vld [vmem:[%s184 + $0x4] sm:$0xf]
    %v187 = vld [vmem:[%s184 + $0x8] sm:$0xf]
    %v188 = vld [vmem:[%s184 + $0xc] sm:$0xf]
    %v189 = vld [vmem:[%s184 + $0x10] sm:$0xf]
    %v190 = vld [vmem:[%s184 + $0x14] sm:$0xf]
    %v191 = vld [vmem:[%s184 + $0x18] sm:$0xf]
    %v192 = vld [vmem:[%s184 + $0x1c] sm:$0xf]
    %v193 = vld [vmem:[%s184 + $0x20] sm:$0xf]
    %v194 = vld [vmem:[%s184 + $0x24] sm:$0xf]
    %v195 = vld [vmem:[%s184 + $0x28] sm:$0xf]
    %v196 = vld [vmem:[%s184 + $0x2c] sm:$0xf]
    %v197 = vld [vmem:[%s184 + $0x30] sm:$0xf]
    %v198 = vld [vmem:[%s184 + $0x34] sm:$0xf]
    %v199 = vld [vmem:[%s184 + $0x38] sm:$0xf]
    %v200 = vld [vmem:[%s184 + $0x3c] sm:$0xf]
    %v201 = vpack.c.bf16 %v181, %v181
    %v218 = vunpack.c.l.b16 %v185
    %v219 = vunpack.c.l.b16 %v186
    %v220 = vunpack.c.l.b16 %v187
    %v221 = vunpack.c.l.b16 %v188
    %v222 = vunpack.c.l.b16 %v189
    %v223 = vunpack.c.l.b16 %v190
    %v224 = vunpack.c.l.b16 %v191
    %v225 = vunpack.c.l.b16 %v192
    %v226 = vunpack.c.l.b16 %v193
    %v227 = vunpack.c.l.b16 %v194
    %v228 = vunpack.c.l.b16 %v195
    %v229 = vunpack.c.l.b16 %v196
    %v230 = vunpack.c.l.b16 %v197
    %v231 = vunpack.c.l.b16 %v198
    %v232 = vunpack.c.l.b16 %v199
    %v233 = vunpack.c.l.b16 %v200
    %v234 = vpack.c.b16 %v219, %v218
    %v235 = vpack.c.b16 %v221, %v220
    %v236 = vpack.c.b16 %v223, %v222
    %v237 = vpack.c.b16 %v225, %v224
    %v238 = vpack.c.b16 %v227, %v226
    %v239 = vpack.c.b16 %v229, %v228
    %v240 = vpack.c.b16 %v231, %v230
    %v241 = vpack.c.b16 %v233, %v232
    %250 = vmatprep.subr.bf16.mxu0 0
    %251 = vmatpush1.bf16.msra.mxu0 %v234
    %252 = vmatprep.subr.bf16.mxu0 0
    %253 = vmatpush1.bf16.msra.mxu0 %v235
    %254 = vmatprep.subr.bf16.mxu0 0
    %255 = vmatpush1.bf16.msra.mxu0 %v236
    %256 = vmatprep.subr.bf16.mxu0 0
    %257 = vmatpush1.bf16.msra.mxu0 %v237
    %258 = vmatprep.subr.bf16.mxu0 0
    %259 = vmatpush1.bf16.msra.mxu0 %v238
    %260 = vmatprep.subr.bf16.mxu0 0
    %261 = vmatpush1.bf16.msra.mxu0 %v239
    %262 = vmatprep.subr.bf16.mxu0 0
    %263 = vmatpush1.bf16.msra.mxu0 %v240
    %264 = vmatprep.subr.bf16.mxu0 0
    %265 = vmatpush1.bf16.msra.mxu0 %v241
    %266 = vmatprep.subr.bf16.mxu0 0
    %267 = vmatpush1.bf16.msra.mxu0 0
    %268 = vmatprep.subr.bf16.mxu0 0
    %269 = vmatpush1.bf16.msra.mxu0 0
    %270 = vmatprep.subr.bf16.mxu0 0
    %271 = vmatpush1.bf16.msra.mxu0 0
    %272 = vmatprep.subr.bf16.mxu0 0
    %273 = vmatpush1.bf16.msra.mxu0 0
    %274 = vmatprep.subr.bf16.mxu0 0
    %275 = vmatpush1.bf16.msra.mxu0 0
    %276 = vmatprep.subr.bf16.mxu0 0
    %277 = vmatpush1.bf16.msra.mxu0 0
    %278 = vmatprep.subr.bf16.mxu0 0
    %279 = vmatpush1.bf16.msra.mxu0 0
    %280 = vmatprep.subr.bf16.mxu0 0
    %281 = vmatpush1.bf16.msra.mxu0 0
    %282 = vmatprep.mubr.bf16.mxu0 0
    %283 = vmatmul.mubr.bf16.gmra.mrb[0].mxu0 %v201
    %v284 = vpop.f32.mrb[0].mxu0
    %v285 = vadd.f32 0.0, %v284
    %v286 = vpop.f32.mrb[0].mxu0
    %v287 = vpop.f32.mrb[0].mxu0
    %v288 = vpop.f32.mrb[0].mxu0
    %289 = vdwg.mxu0
    %v290 = vrot.slane %v285, 4
    %v291 = vadd.f32 %v285, %v290
    %v292 = vrot.slane %v291, 2
    %v293 = vadd.f32 %v291, %v292
    %v294 = vrot.slane %v293, 1
    %v295 = vadd.f32 %v293, %v294
    %v296 = vmul.f32 %v295, 0.125
    %v297 = vmul.f32 %v285, %v285
    %v298 = vrot.slane %v297, 4
    %v299 = vadd.f32 %v297, %v298
    %v300 = vrot.slane %v299, 2
    %v301 = vadd.f32 %v299, %v300
    %v302 = vrot.slane %v301, 1
    %v303 = vadd.f32 %v301, %v302
    %v304 = vmul.f32 %v303, 0.125
    %v305 = vmul.f32 %v296, %v296
    %v306 = vsub.f32 %v304, %v305
    %v307 = vadd.f32 %v306, 1e-05
    %v308 = vrsqrt.pop %v307
    %v309 = vmul.f32 %v183, %v308
    %v310 = vsub.f32 %v285, %v296
    %v311 = vlaneseq
    %v312 = vshrl.u32 %v311, 7
    %v313 = vsub.s32 0, %v312
    %v314 = vrot.slane %v309, %v313
    %v315 = vmul.f32 %v310, %v314
    %v316 = vlaneseq
    %v317 = vshrl.u32 %v316, 7
    %v318 = vsub.s32 1, %v317
    %v319 = vrot.slane %v183, %v318
    %v320 = vadd.f32 %v315, %v319
    %v321 = vmul.f32 %v320, %v42
    %v322 = vadd.f32 %v321, %v181
    %s323 = scalar_lea.vmem %s2, 4
    %v324 = vld [vmem:[%s323] sm:$0x3]
    %s325 = scalar_lea.vmem [#allocation5], 128
    %v326 = vld [vmem:[%s325] sm:$0xf]
    %v327 = vld [vmem:[%s325 + $0x4] sm:$0xf]
    %v328 = vld [vmem:[%s325 + $0x8] sm:$0xf]
    %v329 = vld [vmem:[%s325 + $0xc] sm:$0xf]
    %v330 = vld [vmem:[%s325 + $0x10] sm:$0xf]
    %v331 = vld [vmem:[%s325 + $0x14] sm:$0xf]
    %v332 = vld [vmem:[%s325 + $0x18] sm:$0xf]
    %v333 = vld [vmem:[%s325 + $0x1c] sm:$0xf]
    %v334 = vld [vmem:[%s325 + $0x20] sm:$0xf]
    %v335 = vld [vmem:[%s325 + $0x24] sm:$0xf]
    %v336 = vld [vmem:[%s325 + $0x28] sm:$0xf]
    %v337 = vld [vmem:[%s325 + $0x2c] sm:$0xf]
    %v338 = vld [vmem:[%s325 + $0x30] sm:$0xf]
    %v339 = vld [vmem:[%s325 + $0x34] sm:$0xf]
    %v340 = vld [vmem:[%s325 + $0x38] sm:$0xf]
    %v341 = vld [vmem:[%s325 + $0x3c] sm:$0xf]
    %v342 = vpack.c.bf16 %v322, %v322
    %v359 = vunpack.c.l.b16 %v326
    %v360 = vunpack.c.l.b16 %v327
    %v361 = vunpack.c.l.b16 %v328
    %v362 = vunpack.c.l.b16 %v329
    %v363 = vunpack.c.l.b16 %v330
    %v364 = vunpack.c.l.b16 %v331
    %v365 = vunpack.c.l.b16 %v332
    %v366 = vunpack.c.l.b16 %v333
    %v367 = vunpack.c.l.b16 %v334
    %v368 = vunpack.c.l.b16 %v335
    %v369 = vunpack.c.l.b16 %v336
    %v370 = vunpack.c.l.b16 %v337
    %v371 = vunpack.c.l.b16 %v338
    %v372 = vunpack.c.l.b16 %v339
    %v373 = vunpack.c.l.b16 %v340
    %v374 = vunpack.c.l.b16 %v341
    %v375 = vpack.c.b16 %v360, %v359
    %v376 = vpack.c.b16 %v362, %v361
    %v377 = vpack.c.b16 %v364, %v363
    %v378 = vpack.c.b16 %v366, %v365
    %v379 = vpack.c.b16 %v368, %v367
    %v380 = vpack.c.b16 %v370, %v369
    %v381 = vpack.c.b16 %v372, %v371
    %v382 = vpack.c.b16 %v374, %v373
    %391 = vmatprep.subr.bf16.mxu0 0
    %392 = vmatpush1.bf16.msra.mxu0 %v375
    %393 = vmatprep.subr.bf16.mxu0 0
    %394 = vmatpush1.bf16.msra.mxu0 %v376
    %395 = vmatprep.subr.bf16.mxu0 0
    %396 = vmatpush1.bf16.msra.mxu0 %v377
    %397 = vmatprep.subr.bf16.mxu0 0
    %398 = vmatpush1.bf16.msra.mxu0 %v378
    %399 = vmatprep.subr.bf16.mxu0 0
    %400 = vmatpush1.bf16.msra.mxu0 %v379
    %401 = vmatprep.subr.bf16.mxu0 0
    %402 = vmatpush1.bf16.msra.mxu0 %v380
    %403 = vmatprep.subr.bf16.mxu0 0
    %404 = vmatpush1.bf16.msra.mxu0 %v381
    %405 = vmatprep.subr.bf16.mxu0 0
    %406 = vmatpush1.bf16.msra.mxu0 %v382
    %407 = vmatprep.subr.bf16.mxu0 0
    %408 = vmatpush1.bf16.msra.mxu0 0
    %409 = vmatprep.subr.bf16.mxu0 0
    %410 = vmatpush1.bf16.msra.mxu0 0
    %411 = vmatprep.subr.bf16.mxu0 0
    %412 = vmatpush1.bf16.msra.mxu0 0
    %413 = vmatprep.subr.bf16.mxu0 0
    %414 = vmatpush1.bf16.msra.mxu0 0
    %415 = vmatprep.subr.bf16.mxu0 0
    %416 = vmatpush1.bf16.msra.mxu0 0
    %417 = vmatprep.subr.bf16.mxu0 0
    %418 = vmatpush1.bf16.msra.mxu0 0
    %419 = vmatprep.subr.bf16.mxu0 0
    %420 = vmatpush1.bf16.msra.mxu0 0
    %421 = vmatprep.subr.bf16.mxu0 0
    %422 = vmatpush1.bf16.msra.mxu0 0
    %423 = vmatprep.mubr.bf16.mxu0 0
    %424 = vmatmul.mubr.bf16.gmra.mrb[0].mxu0 %v342
    %v425 = vpop.f32.mrb[0].mxu0
    %v426 = vadd.f32 0.0, %v425
    %v427 = vpop.f32.mrb[0].mxu0
    %v428 = vpop.f32.mrb[0].mxu0
    %v429 = vpop.f32.mrb[0].mxu0
    %430 = vdwg.mxu0
    %v431 = vrot.slane %v426, 4
    %v432 = vadd.f32 %v426, %v431
    %v433 = vrot.slane %v432, 2
    %v434 = vadd.f32 %v432, %v433
    %v435 = vrot.slane %v434, 1
    %v436 = vadd.f32 %v434, %v435
    %v437 = vmul.f32 %v436, 0.125
    %v438 = vmul.f32 %v426, %v426
    %v439 = vrot.slane %v438, 4
    %v440 = vadd.f32 %v438, %v439
    %v441 = vrot.slane %v440, 2
    %v442 = vadd.f32 %v440, %v441
    %v443 = vrot.slane %v442, 1
    %v444 = vadd.f32 %v442, %v443
    %v445 = vmul.f32 %v444, 0.125
    %v446 = vmul.f32 %v437, %v437
    %v447 = vsub.f32 %v445, %v446
    %v448 = vadd.f32 %v447, 1e-05
    %v449 = vrsqrt.pop %v448
    %v450 = vmul.f32 %v324, %v449
    %v451 = vsub.f32 %v426, %v437
    %v452 = vlaneseq
    %v453 = vshrl.u32 %v452, 7
    %v454 = vsub.s32 0, %v453
    %v455 = vrot.slane %v450, %v454
    %v456 = vmul.f32 %v451, %v455
    %v457 = vlaneseq
    %v458 = vshrl.u32 %v457, 7
    %v459 = vsub.s32 1, %v458
    %v460 = vrot.slane %v324, %v459
    %v461 = vadd.f32 %v456, %v460
    %v462 = vmul.f32 %v461, %v42
    %v463 = vadd.f32 %v462, %v322
    %464 = vst [vmem:[#allocation7] sm:$0xff] %v463
    // Predicated region
    $region22: #{tpu_custom_call.1} parent=1 // pred_check
      _
    $region23: #{tpu_custom_call.1} parent=1 // pred_check_branch
      %466 = sbr.rel (0) target = $region25
    $region24: #{tpu_custom_call.1} parent=1 // pred_region
      %s468 = ssub.s32 128, 128
      %469 = vsyncadd [#allocation4], %s468
      %s471 = sshll.u32 [#allocation7], 4
      %s472 = int_to_ptr.vmem [resolvable:$true] %s471
      %474 = dma.vmem_to_hbm [thread:$0]  %s472, 128, %s3, [#allocation4]
    $region25: #{tpu_custom_call.1} parent=1 // pred_fallthru
      _
    // Predicated region
    $region26: #{tpu_custom_call.1} parent=1 // pred_check
      _
    $region27: #{tpu_custom_call.1} parent=1 // pred_check_branch
      %476 = sbr.rel (0) target = $region29
    $region28: #{tpu_custom_call.1} parent=1 // pred_region
      %477 = dma.done [#allocation4], 128
    $region29: #{tpu_custom_call.1} parent=1 // pred_fallthru
      _
    %478 = vsyncpa [#allocation3], 1
    %479 = vsyncpa [#allocation6], 1
    %480 = vsyncpa [#allocation4], 1

</llo_original>
